<compile_context>
chip_gen: v7x
topology: tpu7x:2x2x1
jax: 0.10.0
libtpu: 0.0.40
codegen_flags: <defaults>
</compile_context>

<pallas_src>
import functools

import jax
import jax.numpy as jnp
from jax import lax
from jax.experimental import pallas as pl
from jax.experimental.pallas import tpu as pltpu

_EPS = 1e-12  # F.normalize default eps


def _memory_all_kernel(x_ref, mn_ref, m12t_ref, out_ref, *score_out):
    """One (batch, hw-tile) block of the MemoryN2N 'all' forward.

    x_ref    : (1, c, thw)      NCHW features, h*w flattened on the lane dim
    mn_ref   : (k, c)           pre-normalized feat_units (hoisted)
    m12t_ref : (c4, k)          [feat_units ; label_units]^T  (c4 = c + 4)
    out_ref  : (1, 2c+4, thw)   fused [x ; out_x ; out_y], NCHW layout
    score_out: optional (thw, k) row-major score tile
    """
    c = x_ref.shape[1]
    c4 = m12t_ref.shape[0]

    x = x_ref[0].astype(jnp.float32)              # (c, thw)
    mn = mn_ref[...].astype(jnp.float32)          # (k, c)
    m12t = m12t_ref[...].astype(jnp.float32)      # (c4, k)

    # Column-wise L2 normalize == F.normalize(x, dim=1) on the row-major view:
    # x / max(||x||, eps)  ==  x * rsqrt(max(sum(x^2), eps^2)).
    sumsq = jnp.sum(x * x, axis=0, keepdims=True)             # (1, thw)
    xn = x * lax.rsqrt(jnp.maximum(sumsq, _EPS * _EPS))       # (c, thw)

    # score^T = mn @ xn : native (M,K)x(K,N) MXU matmul, no implicit transpose.
    score_t = jnp.dot(mn, xn, preferred_element_type=jnp.float32)   # (k, thw)

    # Softmax over k (the sublane axis) -> lane-dense (1, thw) reductions.
    s = score_t - jnp.max(score_t, axis=0, keepdims=True)
    e = jnp.exp(s)
    denom = jnp.sum(e, axis=0, keepdims=True)                 # (1, thw)
    inv = pl.reciprocal(denom, approx=True)
    inv = inv * (2.0 - denom * inv)    # one Newton step: ~f32 accurate, cheap
    weight = e * inv                                          # (k, thw)

    # Fused readout: out^T = [m1 ; m2]^T @ weight -> (c4, thw), native MXU form.
    out_t = jnp.dot(m12t, weight, preferred_element_type=jnp.float32)  # (c4, thw)

    # Fused output: rows [0:c] = x passthrough, rows [c:2c+4] = readout.
    out_ref[0, pl.ds(0, c), :] = x.astype(out_ref.dtype)
    out_ref[0, pl.ds(c, c4), :] = out_t.astype(out_ref.dtype)

    if score_out:  # static (trace-time) branch: score requested
        score_ref = score_out[0]
        # Single explicit transpose of the score tile (XLU has slack here).
        score_ref[...] = score_t.T.astype(score_ref.dtype)    # (thw, k)


def _pick_tile_hw(b, hw, c, k, with_score, max_tile,
                  vmem_budget=40 * 1024 * 1024):
    """Choose the h*w lane tile and a VMEM limit from the real block footprint."""
    ctot = 2 * c + 4
    c4 = c + 4
    # f32 bytes per lane of the HBM-blocked arrays (double-buffered by Pallas).
    io_per_lane = 4 * (c + ctot + (k if with_score else 0))
    # f32 bytes per lane of in-kernel temporaries (xn, score_t, weight, out_t,
    # transposed score), single-buffered.
    tmp_per_lane = 4 * (c + 2 * k + c4 + (k if with_score else 0))
    per_lane = 2 * io_per_lane + tmp_per_lane
    fit = max(128, (vmem_budget // per_lane) // 128 * 128)

    if hw % 128 != 0:
        # Full-extent lane block (legal for any size). The (thw, k) score
        # output additionally needs thw % 8 == 0 unless there is one image.
        assert hw % 8 == 0 or b == 1, "h*w must be a multiple of 8 (or b == 1)"
        thw = hw
    else:
        thw = max(128, min(max_tile, fit, hw))
        thw -= thw % 128
        while hw % thw:
            thw -= 128
        steps = hw // thw
        if b * steps < 2 and thw % 256 == 0:
            thw //= 2          # >= 2 grid points so megacore can shard
        elif (b * steps) % 2 == 1 and thw >= 2048 and thw % 256 == 0:
            thw //= 2          # prefer an even grid for the v7x 2-TC split

    resident = 2 * 4 * (k * c + c4 * k)  # mn + m12^T, double-buffered
    vmem_limit = 2 * io_per_lane * thw + tmp_per_lane * thw + resident \
        + (4 << 20)
    vmem_limit = max(vmem_limit, 32 << 20)
    return thw, vmem_limit


@functools.partial(jax.jit, static_argnames=("max_tile_hw", "return_score"))
def memory_n2n_forward_all(x_nchw, feat_units, label_units, *,
                           max_tile_hw=8192, return_score=True):
    """MemoryN2N.forward(x, y=None, update_flag='all').

    x_nchw      : (b, c, h, w) float32
    feat_units  : (k, c)       float32   (nn.Embedding(kdim, hdim).weight)
    label_units : (k, 4)       float32   (nn.Embedding(kdim, 4).weight)
    returns (out, score) with out: (b, 2*c+4, h, w), score: (b*h*w, k)
    (score is None when return_score=False).
    """
    b, c, h, w = x_nchw.shape
    k = feat_units.shape[0]
    hw = h * w
    n = b * hw
    c4 = c + 4
    ctot = 2 * c + 4

    thw, vmem_limit = _pick_tile_hw(b, hw, c, k, return_score, max_tile_hw)
    steps_hw = hw // thw

    # (b, c, h, w) -> (b, c, h*w): a pure reshape, no data movement.
    x_bchw = x_nchw.reshape(b, c, hw)

    # Hoisted, grid-invariant preprocessing of the memory matrices.
    m1 = feat_units.astype(jnp.float32)                        # (k, c)
    m2 = label_units.astype(jnp.float32)                       # (k, 4)
    m_norm = jnp.sqrt(jnp.sum(m1 * m1, axis=1, keepdims=True))
    mn = m1 / jnp.maximum(m_norm, _EPS)                        # (k, c)
    m12_t = jnp.concatenate([m1, m2], axis=1).T                # (c4, k)

    out_shapes = [jax.ShapeDtypeStruct((b, ctot, hw), jnp.float32)]
    out_specs = [pl.BlockSpec((1, ctot, thw), lambda bi, ti: (bi, 0, ti))]
    if return_score:
        out_shapes.append(jax.ShapeDtypeStruct((n, k), jnp.float32))
        out_specs.append(
            pl.BlockSpec((thw, k), lambda bi, ti: (bi * steps_hw + ti, 0)))

    results = pl.pallas_call(
        _memory_all_kernel,
        out_shape=tuple(out_shapes),
        grid_spec=pltpu.PrefetchScalarGridSpec(
            num_scalar_prefetch=0,
            grid=(b, steps_hw),
            in_specs=[
                pl.BlockSpec((1, c, thw), lambda bi, ti: (bi, 0, ti)),   # x
                pl.BlockSpec((k, c), lambda bi, ti: (0, 0)),             # mn
                pl.BlockSpec((c4, k), lambda bi, ti: (0, 0)),            # m12^T
            ],
            out_specs=tuple(out_specs),
        ),
        compiler_params=pltpu.CompilerParams(
            dimension_semantics=("parallel", "parallel"),
            vmem_limit_bytes=int(vmem_limit)),
    )(x_bchw, mn, m12_t)

    if not isinstance(results, (tuple, list)):
        results = (results,)
    out = results[0].reshape(b, ctot, h, w)
    score = results[1] if return_score else None
    return out, score


def _reference_forward_all(x_nchw, m1, m2):
    """Pure-JAX reference mirroring the PyTorch 'all' branch."""
    b, c, h, w = x_nchw.shape
    eps = 1e-12
    x = jnp.transpose(x_nchw, (0, 2, 3, 1)).reshape(-1, c)
    xn = x / jnp.maximum(jnp.linalg.norm(x, axis=1, keepdims=True), eps)
    mn = m1 / jnp.maximum(jnp.linalg.norm(m1, axis=1, keepdims=True), eps)
    score = xn @ mn.T
    weight = jax.nn.softmax(score, axis=1)
    out_x = jnp.transpose((weight @ m1).reshape(b, h, w, c), (0, 3, 1, 2))
    out_y = jnp.transpose((weight @ m2).reshape(b, h, w, 4), (0, 3, 1, 2))
    out = jnp.concatenate([x_nchw, out_x, out_y], axis=1)
    return out, score


if __name__ == "__main__":
    # Small, forward-consistent shapes: batch=2, hdim=32, spatial=16x16, kdim=64.
    b, hdim, kdim, h, w = 2, 32, 64, 16, 16

    key = jax.random.PRNGKey(0)
    kx, kf, kl = jax.random.split(key, 3)

    x = jax.random.normal(kx, (b, hdim, h, w), dtype=jnp.float32)
    # nn.Embedding default init: N(0, 1)
    feat_units = jax.random.normal(kf, (kdim, hdim), dtype=jnp.float32)
    label_units = jax.random.normal(kl, (kdim, 4), dtype=jnp.float32)

    out, score = memory_n2n_forward_all(x, feat_units, label_units)
    jax.block_until_ready((out, score))

    out_ref, score_ref = _reference_forward_all(x, feat_units, label_units)
    assert out.shape == (b, 2 * hdim + 4, h, w)
    assert score.shape == (b * h * w, kdim)
    # score stays f32 end-to-end; out uses rsqrt + Newton-refined reciprocal,
    # so allow a slightly looser (still tight) tolerance there.
    assert jnp.allclose(score, score_ref, atol=1e-4, rtol=1e-4)
    assert jnp.allclose(out, out_ref, atol=2e-3, rtol=2e-3)

    # Exercise the score-free fast path (drops the largest HBM write).
    out_only, none_score = memory_n2n_forward_all(
        x, feat_units, label_units, return_score=False)
    jax.block_until_ready(out_only)
    assert none_score is None
    assert jnp.allclose(out_only, out_ref, atol=2e-3, rtol=2e-3)

    print("KERNEL_OK")
</pallas_src>

<mosaic_0001>
module attributes {stable_mosaic.version = 11 : i64} {
  func.func @_memory_all_kernel(%arg0: i32, %arg1: i32, %arg2: memref<1x32x256xf32, #tpu.memory_space<vmem>>, %arg3: memref<64x32xf32, #tpu.memory_space<vmem>>, %arg4: memref<36x64xf32, #tpu.memory_space<vmem>>, %arg5: memref<1x68x256xf32, #tpu.memory_space<vmem>>, %arg6: memref<256x64xf32, #tpu.memory_space<vmem>>) attributes {dimension_semantics = [#tpu.dimension_semantics<parallel>, #tpu.dimension_semantics<parallel>], iteration_bounds = array<i64: 2, 1>, scalar_prefetch = 0 : i64, scratch_operands = 0 : i64, tpu.core_type = #tpu.core_type<tc>, window_params = [{transform_indices = @transform_0, window_bounds = array<i64: 1, 32, 256>}, {pipeline_mode = #tpu.pipeline_mode<synchronous>, transform_indices = @transform_1, window_bounds = array<i64: 64, 32>}, {pipeline_mode = #tpu.pipeline_mode<synchronous>, transform_indices = @transform_2, window_bounds = array<i64: 36, 64>}, {transform_indices = @transform_3, window_bounds = array<i64: 1, 68, 256>}, {transform_indices = @transform_4, window_bounds = array<i64: 256, 64>}]} {
    %c0 = arith.constant 0 : index
    %c0_0 = arith.constant 0 : index
    %c0_1 = arith.constant 0 : index
    %0 = vector.load %arg2[%c0, %c0_0, %c0_1] : memref<1x32x256xf32, #tpu.memory_space<vmem>>, vector<1x32x256xf32>
    %1 = vector.shape_cast %0 : vector<1x32x256xf32> to vector<32x256xf32>
    %c0_2 = arith.constant 0 : index
    %c0_3 = arith.constant 0 : index
    %2 = vector.load %arg3[%c0_2, %c0_3] : memref<64x32xf32, #tpu.memory_space<vmem>>, vector<64x32xf32>
    %c0_4 = arith.constant 0 : index
    %c0_5 = arith.constant 0 : index
    %3 = vector.load %arg4[%c0_4, %c0_5] : memref<36x64xf32, #tpu.memory_space<vmem>>, vector<36x64xf32>
    %4 = arith.mulf %1, %1 : vector<32x256xf32>
    %cst = arith.constant dense<0.000000e+00> : vector<256xf32>
    %5 = vector.multi_reduction <add>, %4, %cst [0] : vector<32x256xf32> to vector<256xf32>
    %6 = vector.shape_cast %5 : vector<256xf32> to vector<1x256xf32>
    %cst_6 = arith.constant 1.000000e-24 : f32
    %7 = vector.broadcast %cst_6 : f32 to vector<1x256xf32>
    %8 = arith.maximumf %6, %7 : vector<1x256xf32>
    %9 = math.rsqrt %8 : vector<1x256xf32>
    %10 = vector.broadcast %9 : vector<1x256xf32> to vector<32x256xf32>
    %11 = arith.mulf %1, %10 : vector<32x256xf32>
    %cst_7 = arith.constant dense<0.000000e+00> : vector<64x256xf32>
    %12 = tpu.matmul %2, %11, %cst_7 {dimension_numbers = #tpu.dot_dimension_numbers<[1], [0], [0], [1], [0, 0, 1, 1], [], []>} : vector<64x32xf32>, vector<32x256xf32>, vector<64x256xf32> -> vector<64x256xf32>
    %cst_8 = arith.constant dense<0xFF800000> : vector<256xf32>
    %13 = vector.multi_reduction <maximumf>, %12, %cst_8 [0] : vector<64x256xf32> to vector<256xf32>
    %14 = vector.shape_cast %13 : vector<256xf32> to vector<1x256xf32>
    %15 = vector.broadcast %14 : vector<1x256xf32> to vector<64x256xf32>
    %16 = arith.subf %12, %15 : vector<64x256xf32>
    %17 = math.exp %16 : vector<64x256xf32>
    %cst_9 = arith.constant dense<0.000000e+00> : vector<256xf32>
    %18 = vector.multi_reduction <add>, %17, %cst_9 [0] : vector<64x256xf32> to vector<256xf32>
    %19 = vector.shape_cast %18 : vector<256xf32> to vector<1x256xf32>
    %20 = tpu.reciprocal %19 {approx = true} : vector<1x256xf32> -> vector<1x256xf32>
    %21 = arith.mulf %19, %20 : vector<1x256xf32>
    %cst_10 = arith.constant 2.000000e+00 : f32
    %22 = vector.broadcast %cst_10 : f32 to vector<1x256xf32>
    %23 = arith.subf %22, %21 : vector<1x256xf32>
    %24 = arith.mulf %20, %23 : vector<1x256xf32>
    %25 = vector.broadcast %24 : vector<1x256xf32> to vector<64x256xf32>
    %26 = arith.mulf %17, %25 : vector<64x256xf32>
    %cst_11 = arith.constant dense<0.000000e+00> : vector<36x256xf32>
    %27 = tpu.matmul %3, %26, %cst_11 {dimension_numbers = #tpu.dot_dimension_numbers<[1], [0], [0], [1], [0, 0, 1, 1], [], []>} : vector<36x64xf32>, vector<64x256xf32>, vector<36x256xf32> -> vector<36x256xf32>
    %c0_12 = arith.constant 0 : index
    %c0_13 = arith.constant 0 : index
    %c0_14 = arith.constant 0 : index
    %28 = vector.load %arg5[%c0_12, %c0_13, %c0_14] : memref<1x68x256xf32, #tpu.memory_space<vmem>>, vector<1x32x256xf32>
    %29 = vector.shape_cast %28 : vector<1x32x256xf32> to vector<32x256xf32>
    %30 = vector.shape_cast %1 : vector<32x256xf32> to vector<1x32x256xf32>
    tpu.vector_store %arg5[%c0_12, %c0_13, %c0_14], %30 {strides = array<i32>} : memref<1x68x256xf32, #tpu.memory_space<vmem>>, vector<1x32x256xf32>,
    %c0_15 = arith.constant 0 : index
    %c32 = arith.constant 32 : index
    %c0_16 = arith.constant 0 : index
    %31 = vector.load %arg5[%c0_15, %c32, %c0_16] : memref<1x68x256xf32, #tpu.memory_space<vmem>>, vector<1x36x256xf32>
    %32 = vector.shape_cast %31 : vector<1x36x256xf32> to vector<36x256xf32>
    %33 = vector.shape_cast %27 : vector<36x256xf32> to vector<1x36x256xf32>
    tpu.vector_store %arg5[%c0_15, %c32, %c0_16], %33 {strides = array<i32>} : memref<1x68x256xf32, #tpu.memory_space<vmem>>, vector<1x36x256xf32>,
    %34 = tpu.transpose %12, [1, 0] : vector<64x256xf32> -> vector<256x64xf32>
    %c0_17 = arith.constant 0 : index
    %c0_18 = arith.constant 0 : index
    %35 = vector.load %arg6[%c0_17, %c0_18] : memref<256x64xf32, #tpu.memory_space<vmem>>, vector<256x64xf32>
    tpu.vector_store %arg6[%c0_17, %c0_18], %34 {strides = array<i32>} : memref<256x64xf32, #tpu.memory_space<vmem>>, vector<256x64xf32>,
    return
  }
  func.func @transform_0(%arg0: i32, %arg1: i32) -> (i32, i32, i32) {
    %c0_i32 = arith.constant 0 : i32
    %c0_i32_0 = arith.constant 0 : i32
    return %arg0, %c0_i32, %arg1 : i32, i32, i32
  }
  func.func @transform_1(%arg0: i32, %arg1: i32) -> (i32, i32) {
    %c0_i32 = arith.constant 0 : i32
    %c0_i32_0 = arith.constant 0 : i32
    %c0_i32_1 = arith.constant 0 : i32
    return %c0_i32, %c0_i32_0 : i32, i32
  }
  func.func @transform_2(%arg0: i32, %arg1: i32) -> (i32, i32) {
    %c0_i32 = arith.constant 0 : i32
    %c0_i32_0 = arith.constant 0 : i32
    %c0_i32_1 = arith.constant 0 : i32
    return %c0_i32, %c0_i32_0 : i32, i32
  }
  func.func @transform_3(%arg0: i32, %arg1: i32) -> (i32, i32, i32) {
    %c0_i32 = arith.constant 0 : i32
    %c0_i32_0 = arith.constant 0 : i32
    return %arg0, %c0_i32, %arg1 : i32, i32, i32
  }
  func.func @transform_4(%arg0: i32, %arg1: i32) -> (i32, i32) {
    %c1_i32 = arith.constant 1 : i32
    %0 = arith.muli %arg0, %c1_i32 : i32
    %1 = arith.addi %0, %arg1 : i32
    %c0_i32 = arith.constant 0 : i32
    %c0_i32_0 = arith.constant 0 : i32
    return %1, %c0_i32 : i32, i32
  }
}

</mosaic_0001>

<llo_original>
// kernel: memory_n2n_forward_all.1
$region0: #{memory_n2n_forward_all.1}
  #allocation0 [shape = 'u32[]', space=smem, size = 0x4, offset = 0x4, fixed_abs, tag = 'smem constant byte address 0x4 - core index']
  #allocation1 [shape = 'u32[144,128]{1,0:T(1,128)}', space=vmem, size = 0x12000, scoped, tag = 'internal scratch']
  %s0 = inlined_call_operand.vmem [shape: f32[2,32,256], index: 0, kind: input, shape index: {}]
  %s1 = inlined_call_operand.vmem [shape: f32[64,32], index: 1, kind: input, shape index: {}]
  %s2 = inlined_call_operand.vmem [shape: f32[36,64], index: 2, kind: input, shape index: {}]
  %s3 = inlined_call_operand.vmem [shape: f32[2,68,256], index: 3, kind: output, shape index: {0}]
  %s4 = inlined_call_operand.vmem [shape: f32[512,64], index: 4, kind: output, shape index: {1}]
  %5 = xla_tuple %s3, %s4
  %s6 = sld [smem:[#allocation0]]
  $region53: #{memory_n2n_forward_all.1} parent=0
    _
  %s8 = ssub.s32 1, %s6
  %s9 = scalar_select 0, %s8, %s6
  loop: start=0, step=1, limit=4
  $region2: #{memory_n2n_forward_all.1} parent=0 // loop_pre_header
    _
  $region3: #{memory_n2n_forward_all.1} parent=0 // loop_header
    %s11 = sphi 0, %s15
    %p12 = scmp.ge.s32.totalorder %s11, 4
    %s18 = sphi 0, %s30
    %s19 = sphi 0, %s26
    %s20 = sphi 0, %s18
    %s21 = sphi 0, %s19
    %s22 = sphi 0, %s20
    %s23 = sphi 0, %s21
    %s35 = sphi 0, %s37
    %s38 = sphi 0, %s35
    %s39 = sphi 0, %s38
    %s55 = sphi 0, %s39
    %s59 = sphi 0, %s59
    %s61 = sphi 0, %s59
    %s62 = sphi 0, %s61
    %s76 = sphi 0, %s62
    %s80 = sphi 0, %s80
    %s82 = sphi 0, %s80
    %s83 = sphi 0, %s82
    %s97 = sphi 0, %s83
    %s105 = sphi 0, %s107
    %s108 = sphi 0, %s105
    %s109 = sphi 0, %s108
    %s125 = sphi 0, %s109
    %s133 = sphi 0, %s135
    %s136 = sphi 0, %s133
    %s137 = sphi 0, %s136
    %s153 = sphi 0, %s137
  $region4: #{memory_n2n_forward_all.1} parent=0 // loop_header_branch
    %14 = sbr.rel (%p12) target = $region8
  $region5: #{memory_n2n_forward_all.1} parent=0 // loop_body
    %s16 = ssub.s32 %s11, 1
    %s17 = ssub.s32 %s11, 2
    %s24 = sadd.s32 1, %s19
    %p25 = scmp.ge.s32.totalorder %s24, 1
    %s26 = scalar_select %p25, 0, %s24
    %s27 = sadd.s32 1, %s18
    %s28 = scalar_select %p25, %s27, %s18
    %p29 = scmp.ge.s32.totalorder %s28, 2
    %s30 = scalar_select %p29, 0, %s28
    %s31 = ssub.s32 %s18, %s30
    %s32 = ssub.s32 %s19, %s26
    %s33 = sor.u32 %s31, %s32
    %p34 = scmp.eq.s32.totalorder %s33, 0
    %s36 = sadd.s32 %s35, 1
    %s37 = scalar_select %p34, %s35, %s36
    %p40 = pneg %p34
    %p41 = scmp.eq.s32.totalorder %s11, 1
    %p42 = por %p40, %p41
    %p43 = scmp.ne.s32.totalorder %s35, %s38
    %p44 = scmp.eq.s32.totalorder %s11, 0
    %p45 = por %p43, %p44
    %p46 = scmp.ne.s32.totalorder %s35, %s38
    %p47 = scmp.eq.s32.totalorder %s16, 1
    %p48 = por %p46, %p47
    %p49 = scmp.ne.s32.totalorder %s38, %s39
    %p50 = scmp.eq.s32.totalorder %s16, 0
    %p51 = por %p49, %p50
    %p52 = scmp.ne.s32.totalorder %s38, %s39
    %p53 = scmp.eq.s32.totalorder %s17, 1
    %p54 = por %p52, %p53
    %p56 = scmp.ne.s32.totalorder %s39, %s55
    %p57 = scmp.eq.s32.totalorder %s17, 0
    %p58 = por %p56, %p57
    %s60 = sadd.s32 %s59, 1
    %p63 = scmp.eq.s32.totalorder %s11, 1
    %p64 = scmp.ne.s32.totalorder %s59, %s61
    %p65 = scmp.eq.s32.totalorder %s11, 0
    %p66 = por %p64, %p65
    %p67 = scmp.ne.s32.totalorder %s59, %s61
    %p68 = scmp.eq.s32.totalorder %s16, 1
    %p69 = por %p67, %p68
    %p70 = scmp.ne.s32.totalorder %s61, %s62
    %p71 = scmp.eq.s32.totalorder %s16, 0
    %p72 = por %p70, %p71
    %p73 = scmp.ne.s32.totalorder %s61, %s62
    %p74 = scmp.eq.s32.totalorder %s17, 1
    %p75 = por %p73, %p74
    %p77 = scmp.ne.s32.totalorder %s62, %s76
    %p78 = scmp.eq.s32.totalorder %s17, 0
    %p79 = por %p77, %p78
    %s81 = sadd.s32 %s80, 1
    %p84 = scmp.eq.s32.totalorder %s11, 1
    %p85 = scmp.ne.s32.totalorder %s80, %s82
    %p86 = scmp.eq.s32.totalorder %s11, 0
    %p87 = por %p85, %p86
    %p88 = scmp.ne.s32.totalorder %s80, %s82
    %p89 = scmp.eq.s32.totalorder %s16, 1
    %p90 = por %p88, %p89
    %p91 = scmp.ne.s32.totalorder %s82, %s83
    %p92 = scmp.eq.s32.totalorder %s16, 0
    %p93 = por %p91, %p92
    %p94 = scmp.ne.s32.totalorder %s82, %s83
    %p95 = scmp.eq.s32.totalorder %s17, 1
    %p96 = por %p94, %p95
    %p98 = scmp.ne.s32.totalorder %s83, %s97
    %p99 = scmp.eq.s32.totalorder %s17, 0
    %p100 = por %p98, %p99
    %s101 = ssub.s32 %s18, %s30
    %s102 = ssub.s32 %s19, %s26
    %s103 = sor.u32 %s101, %s102
    %p104 = scmp.eq.s32.totalorder %s103, 0
    %s106 = sadd.s32 %s105, 1
    %s107 = scalar_select %p104, %s105, %s106
    %p110 = pneg %p104
    %p111 = scmp.eq.s32.totalorder %s11, 1
    %p112 = por %p110, %p111
    %p113 = scmp.ne.s32.totalorder %s105, %s108
    %p114 = scmp.eq.s32.totalorder %s11, 0
    %p115 = por %p113, %p114
    %p116 = scmp.ne.s32.totalorder %s105, %s108
    %p117 = scmp.eq.s32.totalorder %s16, 1
    %p118 = por %p116, %p117
    %p119 = scmp.ne.s32.totalorder %s108, %s109
    %p120 = scmp.eq.s32.totalorder %s16, 0
    %p121 = por %p119, %p120
    %p122 = scmp.ne.s32.totalorder %s108, %s109
    %p123 = scmp.eq.s32.totalorder %s17, 1
    %p124 = por %p122, %p123
    %p126 = scmp.ne.s32.totalorder %s109, %s125
    %p127 = scmp.eq.s32.totalorder %s17, 0
    %p128 = por %p126, %p127
    %s129 = sadd.s32 %s18, %s19
    %s130 = sadd.s32 %s30, %s26
    %s131 = ssub.s32 %s129, %s130
    %p132 = scmp.eq.s32.totalorder %s131, 0
    %s134 = sadd.s32 %s133, 1
    %s135 = scalar_select %p132, %s133, %s134
    %p138 = pneg %p132
    %p139 = scmp.eq.s32.totalorder %s11, 1
    %p140 = por %p138, %p139
    %p141 = scmp.ne.s32.totalorder %s133, %s136
    %p142 = scmp.eq.s32.totalorder %s11, 0
    %p143 = por %p141, %p142
    %p144 = scmp.ne.s32.totalorder %s133, %s136
    %p145 = scmp.eq.s32.totalorder %s16, 1
    %p146 = por %p144, %p145
    %p147 = scmp.ne.s32.totalorder %s136, %s137
    %p148 = scmp.eq.s32.totalorder %s16, 0
    %p149 = por %p147, %p148
    %p150 = scmp.ne.s32.totalorder %s136, %s137
    %p151 = scmp.eq.s32.totalorder %s17, 1
    %p152 = por %p150, %p151
    %p154 = scmp.ne.s32.totalorder %s137, %s153
    %p155 = scmp.eq.s32.totalorder %s17, 0
    %p156 = por %p154, %p155
    %p157 = scmp.le.s32.totalorder 1, %s11
    %p158 = scmp.lt.s32.totalorder %s11, 3
    %p159 = pnand %p157, %p158
    %p160 = pneg %p159
    // Predicated region
    $region9: #{memory_n2n_forward_all.1} parent=5 // pred_check
      _
    $region10: #{memory_n2n_forward_all.1} parent=5 // pred_check_branch
      %162 = sbr.rel (%p159) target = $region12
    $region11: #{memory_n2n_forward_all.1} parent=5 // pred_region
      %s163 = ssub.s32 %s11, 1
      // Predicated region
      $region13: #{memory_n2n_forward_all.1} parent=11 // pred_check
        %p164 = pneg %p72
      $region14: #{memory_n2n_forward_all.1} parent=11 // pred_check_branch
        %166 = sbr.rel (%p164) target = $region16
      $region15: #{memory_n2n_forward_all.1} parent=11 // pred_region
        _
      $region16: #{memory_n2n_forward_all.1} parent=11 // pred_fallthru
        _
      // Predicated region
      $region17: #{memory_n2n_forward_all.1} parent=11 // pred_check
        %p167 = pneg %p93
      $region18: #{memory_n2n_forward_all.1} parent=11 // pred_check_branch
        %169 = sbr.rel (%p167) target = $region20
      $region19: #{memory_n2n_forward_all.1} parent=11 // pred_region
        _
      $region20: #{memory_n2n_forward_all.1} parent=11 // pred_fallthru
        _
    $region12: #{memory_n2n_forward_all.1} parent=5 // pred_fallthru
      _
    %p170 = scmp.lt.s32.totalorder %s11, 2
    // Predicated region
    $region21: #{memory_n2n_forward_all.1} parent=5 // pred_check
      %p171 = pneg %p170
    $region22: #{memory_n2n_forward_all.1} parent=5 // pred_check_branch
      %173 = sbr.rel (%p171) target = $region24
    $region23: #{memory_n2n_forward_all.1} parent=5 // pred_region
      // Predicated region
      $region25: #{memory_n2n_forward_all.1} parent=23 // pred_check
        %p174 = pneg %p45
      $region26: #{memory_n2n_forward_all.1} parent=23 // pred_check_branch
        %176 = sbr.rel (%p174) target = $region28
      $region27: #{memory_n2n_forward_all.1} parent=23 // pred_region
        %s177 = smul.u32 2, %s19
        %p178 = scmp.lt.s32.totalorder %s18, 1
        %s179 = scalar_select %p178, %s18, 1
        %p180 = scmp.lt.s32.totalorder %s177, 1
        %s181 = scalar_select %p180, %s177, 1
        %s182 = smul.addr %s179, 8
        %s183 = sadd.s32 %s181, %s182
        %s184 = smul.addr %s183, 8
        %s185 = scalar_lea.vmem %s0, %s184
        %s186 = smul.u32 2, %s19
      $region28: #{memory_n2n_forward_all.1} parent=23 // pred_fallthru
        _
    $region24: #{memory_n2n_forward_all.1} parent=5 // pred_fallthru
      _
    %p187 = scmp.le.s32.totalorder 1, %s11
    %p188 = scmp.lt.s32.totalorder %s11, 3
    %p189 = pnand %p187, %p188
    %p190 = pneg %p189
    // Predicated region
    $region29: #{memory_n2n_forward_all.1} parent=5 // pred_check
      _
    $region30: #{memory_n2n_forward_all.1} parent=5 // pred_check_branch
      %192 = sbr.rel (%p189) target = $region32
    $region31: #{memory_n2n_forward_all.1} parent=5 // pred_region
      %s193 = ssub.s32 %s11, 1
      %s194 = smul.u32 2, %s21
      %p195 = scmp.lt.s32.totalorder %s20, 1
      %s196 = scalar_select %p195, %s20, 1
      %p197 = scmp.lt.s32.totalorder %s194, 1
      %s198 = scalar_select %p197, %s194, 1
      %s199 = smul.addr %s196, 8
      %s200 = sadd.s32 %s198, %s199
      %s201 = smul.addr %s200, 8
      %s202 = scalar_lea.vmem %s0, %s201
      %p203 = pneg %p51
      %p204 = pneg %p48
      %p205 = pneg %p72
      %p206 = pneg %p69
      %p207 = pneg %p93
      %p208 = pneg %p90
      %p209 = pneg %p121
      %p210 = pneg %p118
      %s211 = smul.u32 2, %s21
      %p212 = scmp.lt.s32.totalorder %s20, 1
      %s213 = scalar_select %p212, %s20, 1
      %p214 = scmp.lt.s32.totalorder %s211, 1
      %s215 = scalar_select %p214, %s211, 1
      %s216 = smul.addr %s213, 18
      %s217 = sadd.s32 %s215, %s216
      %s218 = smul.addr %s217, 8
      %s219 = scalar_lea.vmem %s3, %s218
      %p220 = pneg %p149
      %p221 = pneg %p146
      %s222 = sadd.s32 %s20, %s21
      %s223 = smul.u32 32, %s222
      %p224 = scmp.lt.s32.totalorder %s223, 63
      %s225 = scalar_select %p224, %s223, 63
      %s226 = smul.addr %s225, 8
      %s227 = scalar_lea.vmem %s4, %s226
      %s228 = smul.u32 2, %s21
      %p229 = scmp.lt.s32.totalorder %s20, 1
      %s230 = scalar_select %p229, %s20, 1
      %p231 = scmp.lt.s32.totalorder %s228, 1
      %s232 = scalar_select %p231, %s228, 1
      %s233 = smul.addr %s230, 8
      %s234 = sadd.s32 %s232, %s233
      %s235 = smul.addr %s234, 8
      %s236 = scalar_lea.vmem %s0, %s235
      %s237 = smul.u32 2, %s21
      %s238 = smul.u32 2, %s21
      %p239 = scmp.lt.s32.totalorder %s20, 1
      %s240 = scalar_select %p239, %s20, 1
      %p241 = scmp.lt.s32.totalorder %s238, 1
      %s242 = scalar_select %p241, %s238, 1
      %s243 = smul.addr %s240, 18
      %s244 = sadd.s32 %s242, %s243
      %s245 = smul.addr %s244, 8
      %s246 = scalar_lea.vmem %s3, %s245
      %s247 = smul.u32 2, %s21
      %s248 = sadd.s32 %s20, %s21
      %s249 = smul.u32 32, %s248
      %p250 = scmp.lt.s32.totalorder %s249, 63
      %s251 = scalar_select %p250, %s249, 63
      %s252 = smul.addr %s251, 8
      %s253 = scalar_lea.vmem %s4, %s252
      %s254 = sadd.s32 %s20, %s21
      %s255 = smul.u32 32, %s254
      %v256 = vld [vmem:[%s236] sm:$0xff]
      %v257 = vld [vmem:[%s236 + $0x8] sm:$0xff]
      %v258 = vld [vmem:[%s236 + $0x10] sm:$0xff]
      %v259 = vld [vmem:[%s236 + $0x18] sm:$0xff]
      %v260 = vld [vmem:[%s236 + $0x20] sm:$0xff]
      %v261 = vld [vmem:[%s236 + $0x28] sm:$0xff]
      %v262 = vld [vmem:[%s236 + $0x30] sm:$0xff]
      %v263 = vld [vmem:[%s236 + $0x38] sm:$0xff]
      %v264 = vld [vmem:[%s1] sm:$0xff]
      %v265 = vld [vmem:[%s1 + $0x8] sm:$0xff]
      %v266 = vld [vmem:[%s1 + $0x10] sm:$0xff]
      %v267 = vld [vmem:[%s1 + $0x18] sm:$0xff]
      %v268 = vld [vmem:[%s1 + $0x20] sm:$0xff]
      %v269 = vld [vmem:[%s1 + $0x28] sm:$0xff]
      %v270 = vld [vmem:[%s1 + $0x30] sm:$0xff]
      %v271 = vld [vmem:[%s1 + $0x38] sm:$0xff]
      %v272 = vld [vmem:[%s2] sm:$0xff]
      %v273 = vld [vmem:[%s2 + $0x8] sm:$0xff]
      %v274 = vld [vmem:[%s2 + $0x10] sm:$0xff]
      %v275 = vld [vmem:[%s2 + $0x18] sm:$0xff]
      %v276 = vld [vmem:[%s2 + $0x20] sm:$0xf]
      %v277 = vmul.f32 %v256, %v256
      %v278 = vmul.f32 %v257, %v257
      %v279 = vmul.f32 %v258, %v258
      %v280 = vmul.f32 %v259, %v259
      %v281 = vmul.f32 %v260, %v260
      %v282 = vmul.f32 %v261, %v261
      %v283 = vmul.f32 %v262, %v262
      %v284 = vmul.f32 %v263, %v263
      %v285 = vadd.f32 %v277, %v279
      %v286 = vadd.f32 %v285, %v281
      %v287 = vadd.f32 %v286, %v283
      %v288 = vrot.slane %v287, 4
      %v289 = vadd.f32 %v287, %v288
      %v290 = vrot.slane %v289, 2
      %v291 = vadd.f32 %v289, %v290
      %v292 = vrot.slane %v291, 1
      %v293 = vadd.f32 %v291, %v292
      %v294 = vadd.f32 %v278, %v280
      %v295 = vadd.f32 %v294, %v282
      %v296 = vadd.f32 %v295, %v284
      %v297 = vrot.slane %v296, 4
      %v298 = vadd.f32 %v296, %v297
      %v299 = vrot.slane %v298, 2
      %v300 = vadd.f32 %v298, %v299
      %v301 = vrot.slane %v300, 1
      %v302 = vadd.f32 %v300, %v301
      %v303 = vmax.f32 %v293, 1e-24
      %v304 = vmax.f32 %v302, 1e-24
      %v305 = vrsqrt.pop %v303
      %v306 = vrsqrt.pop %v304
      %v307 = vmul.f32 %v256, %v305
      %v308 = vmul.f32 %v257, %v306
      %v309 = vmul.f32 %v258, %v305
      %v310 = vmul.f32 %v259, %v306
      %v311 = vmul.f32 %v260, %v305
      %v312 = vmul.f32 %v261, %v306
      %v313 = vmul.f32 %v262, %v305
      %v314 = vmul.f32 %v263, %v306
      %vm315 = vcmask 261120
      %v317 = vsel %vm315, %v264, 0
      %v320 = vsel %vm315, %v265, 0
      %v323 = vsel %vm315, %v266, 0
      %v326 = vsel %vm315, %v267, 0
      %v329 = vsel %vm315, %v268, 0
      %v332 = vsel %vm315, %v269, 0
      %v335 = vsel %vm315, %v270, 0
      %v338 = vsel %vm315, %v271, 0
      %340 = vmatprep.subr.mxu0 %v308
      %341 = vmatpush1.msra.mxu0 %v307
      %342 = vmatprep.subr.mxu0 %v310
      %343 = vmatpush1.msra.mxu0 %v309
      %344 = vmatprep.subr.mxu0 %v312
      %345 = vmatpush1.msra.mxu0 %v311
      %346 = vmatprep.subr.mxu0 %v314
      %347 = vmatpush1.msra.mxu0 %v313
      %348 = vmatprep.subr.mxu0 0.0
      %349 = vmatpush1.msra.mxu0 0.0
      %350 = vmatprep.subr.mxu0 0.0
      %351 = vmatpush1.msra.mxu0 0.0
      %352 = vmatprep.subr.mxu0 0.0
      %353 = vmatpush1.msra.mxu0 0.0
      %354 = vmatprep.subr.mxu0 0.0
      %355 = vmatpush1.msra.mxu0 0.0
      %356 = vmatprep.subr.mxu0 0.0
      %357 = vmatpush1.msra.mxu0 0.0
      %358 = vmatprep.subr.mxu0 0.0
      %359 = vmatpush1.msra.mxu0 0.0
      %360 = vmatprep.subr.mxu0 0.0
      %361 = vmatpush1.msra.mxu0 0.0
      %362 = vmatprep.subr.mxu0 0.0
      %363 = vmatpush1.msra.mxu0 0.0
      %364 = vmatprep.subr.mxu0 0.0
      %365 = vmatpush1.msra.mxu0 0.0
      %366 = vmatprep.subr.mxu0 0.0
      %367 = vmatpush1.msra.mxu0 0.0
      %368 = vmatprep.subr.mxu0 0.0
      %369 = vmatpush1.msra.mxu0 0.0
      %370 = vmatprep.subr.mxu0 0.0
      %371 = vmatpush1.msra.mxu0 0.0
      %372 = vmatprep.subr.mxu0 0.0
      %373 = vmatpush1.msra.mxu0 0.0
      %374 = vmatprep.subr.mxu0 0.0
      %375 = vmatpush1.msra.mxu0 0.0
      %376 = vmatprep.subr.mxu0 0.0
      %377 = vmatpush1.msra.mxu0 0.0
      %378 = vmatprep.subr.mxu0 0.0
      %379 = vmatpush1.msra.mxu0 0.0
      %380 = vmatprep.subr.mxu0 0.0
      %381 = vmatpush1.msra.mxu0 0.0
      %382 = vmatprep.subr.mxu0 0.0
      %383 = vmatpush1.msra.mxu0 0.0
      %384 = vmatprep.subr.mxu0 0.0
      %385 = vmatpush1.msra.mxu0 0.0
      %386 = vmatprep.subr.mxu0 0.0
      %387 = vmatpush1.msra.mxu0 0.0
      %388 = vmatprep.subr.mxu0 0.0
      %389 = vmatpush1.msra.mxu0 0.0
      %390 = vmatprep.subr.mxu0 0.0
      %391 = vmatpush1.msra.mxu0 0.0
      %392 = vmatprep.subr.mxu0 0.0
      %393 = vmatpush1.msra.mxu0 0.0
      %394 = vmatprep.subr.mxu0 0.0
      %395 = vmatpush1.msra.mxu0 0.0
      %396 = vmatprep.subr.mxu0 0.0
      %397 = vmatpush1.msra.mxu0 0.0
      %398 = vmatprep.subr.mxu0 0.0
      %399 = vmatpush1.msra.mxu0 0.0
      %400 = vmatprep.subr.mxu0 0.0
      %401 = vmatpush1.msra.mxu0 0.0
      %402 = vmatprep.subr.mxu0 0.0
      %403 = vmatpush1.msra.mxu0 0.0
      %404 = vmatprep.mubr.f32.mxu0 0.0
      %405 = vmatmul.mubr.f32.gmra.mrb[0].mxu0 %v317
      %v406 = vpop.f32.mrb[0].mxu0
      %v407 = vadd.f32 0.0, %v406
      %v408 = vpop.f32.mrb[0].mxu0
      %v409 = vadd.f32 0.0, %v408
      %410 = vmatprep.mubr.f32.mxu0 0.0
      %411 = vmatmul.mubr.f32.gmra.mrb[0].mxu0 %v320
      %v412 = vpop.f32.mrb[0].mxu0
      %v413 = vadd.f32 0.0, %v412
      %v414 = vpop.f32.mrb[0].mxu0
      %v415 = vadd.f32 0.0, %v414
      %416 = vmatprep.mubr.f32.mxu0 0.0
      %417 = vmatmul.mubr.f32.gmra.mrb[0].mxu0 %v323
      %v418 = vpop.f32.mrb[0].mxu0
      %v419 = vadd.f32 0.0, %v418
      %v420 = vpop.f32.mrb[0].mxu0
      %v421 = vadd.f32 0.0, %v420
      %422 = vmatprep.mubr.f32.mxu0 0.0
      %423 = vmatmul.mubr.f32.gmra.mrb[0].mxu0 %v326
      %v424 = vpop.f32.mrb[0].mxu0
      %v425 = vadd.f32 0.0, %v424
      %v426 = vpop.f32.mrb[0].mxu0
      %v427 = vadd.f32 0.0, %v426
      %428 = vmatprep.mubr.f32.mxu0 0.0
      %429 = vmatmul.mubr.f32.gmra.mrb[0].mxu0 %v329
      %v430 = vpop.f32.mrb[0].mxu0
      %v431 = vadd.f32 0.0, %v430
      %v432 = vpop.f32.mrb[0].mxu0
      %v433 = vadd.f32 0.0, %v432
      %434 = vmatprep.mubr.f32.mxu0 0.0
      %435 = vmatmul.mubr.f32.gmra.mrb[0].mxu0 %v332
      %v436 = vpop.f32.mrb[0].mxu0
      %v437 = vadd.f32 0.0, %v436
      %v438 = vpop.f32.mrb[0].mxu0
      %v439 = vadd.f32 0.0, %v438
      %440 = vmatprep.mubr.f32.mxu0 0.0
      %441 = vmatmul.mubr.f32.gmra.mrb[0].mxu0 %v335
      %v442 = vpop.f32.mrb[0].mxu0
      %v443 = vadd.f32 0.0, %v442
      %v444 = vpop.f32.mrb[0].mxu0
      %v445 = vadd.f32 0.0, %v444
      %446 = vmatprep.mubr.f32.mxu0 0.0
      %447 = vmatmul.mubr.f32.gmra.mrb[0].mxu0 %v338
      %v448 = vpop.f32.mrb[0].mxu0
      %v449 = vadd.f32 0.0, %v448
      %v450 = vpop.f32.mrb[0].mxu0
      %v451 = vadd.f32 0.0, %v450
      %452 = vdwg.mxu0
      %v453 = vmax.f32 %v407, %v419
      %v454 = vmax.f32 %v413, %v425
      %v455 = vmax.f32 %v453, %v431
      %v456 = vmax.f32 %v454, %v437
      %v457 = vmax.f32 %v455, %v443
      %v458 = vmax.f32 %v456, %v449
      %v459 = vmax.f32 %v457, %v458
      %v460 = vrot.slane %v459, 4
      %v461 = vmax.f32 %v459, %v460
      %v462 = vrot.slane %v461, 2
      %v463 = vmax.f32 %v461, %v462
      %v464 = vrot.slane %v463, 1
      %v465 = vmax.f32 %v463, %v464
      %v466 = vmax.f32 %v409, %v421
      %v467 = vmax.f32 %v415, %v427
      %v468 = vmax.f32 %v466, %v433
      %v469 = vmax.f32 %v467, %v439
      %v470 = vmax.f32 %v468, %v445
      %v471 = vmax.f32 %v469, %v451
      %v472 = vmax.f32 %v470, %v471
      %v473 = vrot.slane %v472, 4
      %v474 = vmax.f32 %v472, %v473
      %v475 = vrot.slane %v474, 2
      %v476 = vmax.f32 %v474, %v475
      %v477 = vrot.slane %v476, 1
      %v478 = vmax.f32 %v476, %v477
      %v479 = vsub.f32 %v407, %v465
      %v480 = vsub.f32 %v409, %v478
      %v481 = vsub.f32 %v413, %v465
      %v482 = vsub.f32 %v415, %v478
      %v483 = vsub.f32 %v419, %v465
      %v484 = vsub.f32 %v421, %v478
      %v485 = vsub.f32 %v425, %v465
      %v486 = vsub.f32 %v427, %v478
      %v487 = vsub.f32 %v431, %v465
      %v488 = vsub.f32 %v433, %v478
      %v489 = vsub.f32 %v437, %v465
      %v490 = vsub.f32 %v439, %v478
      %v491 = vsub.f32 %v443, %v465
      %v492 = vsub.f32 %v445, %v478
      %v493 = vsub.f32 %v449, %v465
      %v494 = vsub.f32 %v451, %v478
      %v495 = vmul.f32 %v479, 1.442695
      %v496 = vpow.pop %v495
      %v497 = vmul.f32 %v480, 1.442695
      %v498 = vpow.pop %v497
      %v499 = vmul.f32 %v481, 1.442695
      %v500 = vpow.pop %v499
      %v501 = vmul.f32 %v482, 1.442695
      %v502 = vpow.pop %v501
      %v503 = vmul.f32 %v483, 1.442695
      %v504 = vpow.pop %v503
      %v505 = vmul.f32 %v484, 1.442695
      %v506 = vpow.pop %v505
      %v507 = vmul.f32 %v485, 1.442695
      %v508 = vpow.pop %v507
      %v509 = vmul.f32 %v486, 1.442695
      %v510 = vpow.pop %v509
      %v511 = vmul.f32 %v487, 1.442695
      %v512 = vpow.pop %v511
      %v513 = vmul.f32 %v488, 1.442695
      %v514 = vpow.pop %v513
      %v515 = vmul.f32 %v489, 1.442695
      %v516 = vpow.pop %v515
      %v517 = vmul.f32 %v490, 1.442695
      %v518 = vpow.pop %v517
      %v519 = vmul.f32 %v491, 1.442695
      %v520 = vpow.pop %v519
      %v521 = vmul.f32 %v492, 1.442695
      %v522 = vpow.pop %v521
      %v523 = vmul.f32 %v493, 1.442695
      %v524 = vpow.pop %v523
      %v525 = vmul.f32 %v494, 1.442695
      %v526 = vpow.pop %v525
      %v527 = vadd.f32 %v496, %v500
      %v528 = vadd.f32 %v527, %v504
      %v529 = vadd.f32 %v528, %v508
      %v530 = vadd.f32 %v529, %v512
      %v531 = vadd.f32 %v530, %v516
      %v532 = vadd.f32 %v531, %v520
      %v533 = vadd.f32 %v532, %v524
      %v534 = vrot.slane %v533, 4
      %v535 = vadd.f32 %v533, %v534
      %v536 = vrot.slane %v535, 2
      %v537 = vadd.f32 %v535, %v536
      %v538 = vrot.slane %v537, 1
      %v539 = vadd.f32 %v537, %v538
      %v540 = vadd.f32 %v498, %v502
      %v541 = vadd.f32 %v540, %v506
      %v542 = vadd.f32 %v541, %v510
      %v543 = vadd.f32 %v542, %v514
      %v544 = vadd.f32 %v543, %v518
      %v545 = vadd.f32 %v544, %v522
      %v546 = vadd.f32 %v545, %v526
      %v547 = vrot.slane %v546, 4
      %v548 = vadd.f32 %v546, %v547
      %v549 = vrot.slane %v548, 2
      %v550 = vadd.f32 %v548, %v549
      %v551 = vrot.slane %v550, 1
      %v552 = vadd.f32 %v550, %v551
      %v553 = vrcp.pop %v539
      %v554 = vrcp.pop %v552
      %v555 = vmul.f32 %v539, %v553
      %v556 = vmul.f32 %v552, %v554
      %v557 = vsub.f32 2.0, %v555
      %v558 = vsub.f32 2.0, %v556
      %v559 = vmul.f32 %v553, %v557
      %v560 = vmul.f32 %v554, %v558
      %v561 = vmul.f32 %v496, %v559
      %v562 = vmul.f32 %v498, %v560
      %v563 = vmul.f32 %v500, %v559
      %v564 = vmul.f32 %v502, %v560
      %v565 = vmul.f32 %v504, %v559
      %v566 = vmul.f32 %v506, %v560
      %v567 = vmul.f32 %v508, %v559
      %v568 = vmul.f32 %v510, %v560
      %v569 = vmul.f32 %v512, %v559
      %v570 = vmul.f32 %v514, %v560
      %v571 = vmul.f32 %v516, %v559
      %v572 = vmul.f32 %v518, %v560
      %v573 = vmul.f32 %v520, %v559
      %v574 = vmul.f32 %v522, %v560
      %v575 = vmul.f32 %v524, %v559
      %v576 = vmul.f32 %v526, %v560
      %vm577 = vcmask 523264
      %v579 = vsel %vm577, %v272, 0
      %v582 = vsel %vm577, %v273, 0
      %v585 = vsel %vm577, %v274, 0
      %v588 = vsel %vm577, %v275, 0
      %v591 = vsel %vm577, %v276, 0
      %593 = vmatprep.subr.mxu0 %v562
      %594 = vmatpush1.msra.mxu0 %v561
      %595 = vmatprep.subr.mxu0 %v564
      %596 = vmatpush1.msra.mxu0 %v563
      %597 = vmatprep.subr.mxu0 %v566
      %598 = vmatpush1.msra.mxu0 %v565
      %599 = vmatprep.subr.mxu0 %v568
      %600 = vmatpush1.msra.mxu0 %v567
      %601 = vmatprep.subr.mxu0 %v570
      %602 = vmatpush1.msra.mxu0 %v569
      %603 = vmatprep.subr.mxu0 %v572
      %604 = vmatpush1.msra.mxu0 %v571
      %605 = vmatprep.subr.mxu0 %v574
      %606 = vmatpush1.msra.mxu0 %v573
      %607 = vmatprep.subr.mxu0 %v576
      %608 = vmatpush1.msra.mxu0 %v575
      %609 = vmatprep.subr.mxu0 0.0
      %610 = vmatpush1.msra.mxu0 0.0
      %611 = vmatprep.subr.mxu0 0.0
      %612 = vmatpush1.msra.mxu0 0.0
      %613 = vmatprep.subr.mxu0 0.0
      %614 = vmatpush1.msra.mxu0 0.0
      %615 = vmatprep.subr.mxu0 0.0
      %616 = vmatpush1.msra.mxu0 0.0
      %617 = vmatprep.subr.mxu0 0.0
      %618 = vmatpush1.msra.mxu0 0.0
      %619 = vmatprep.subr.mxu0 0.0
      %620 = vmatpush1.msra.mxu0 0.0
      %621 = vmatprep.subr.mxu0 0.0
      %622 = vmatpush1.msra.mxu0 0.0
      %623 = vmatprep.subr.mxu0 0.0
      %624 = vmatpush1.msra.mxu0 0.0
      %625 = vmatprep.subr.mxu0 0.0
      %626 = vmatpush1.msra.mxu0 0.0
      %627 = vmatprep.subr.mxu0 0.0
      %628 = vmatpush1.msra.mxu0 0.0
      %629 = vmatprep.subr.mxu0 0.0
      %630 = vmatpush1.msra.mxu0 0.0
      %631 = vmatprep.subr.mxu0 0.0
      %632 = vmatpush1.msra.mxu0 0.0
      %633 = vmatprep.subr.mxu0 0.0
      %634 = vmatpush1.msra.mxu0 0.0
      %635 = vmatprep.subr.mxu0 0.0
      %636 = vmatpush1.msra.mxu0 0.0
      %637 = vmatprep.subr.mxu0 0.0
      %638 = vmatpush1.msra.mxu0 0.0
      %639 = vmatprep.subr.mxu0 0.0
      %640 = vmatpush1.msra.mxu0 0.0
      %641 = vmatprep.subr.mxu0 0.0
      %642 = vmatpush1.msra.mxu0 0.0
      %643 = vmatprep.subr.mxu0 0.0
      %644 = vmatpush1.msra.mxu0 0.0
      %645 = vmatprep.subr.mxu0 0.0
      %646 = vmatpush1.msra.mxu0 0.0
      %647 = vmatprep.subr.mxu0 0.0
      %648 = vmatpush1.msra.mxu0 0.0
      %649 = vmatprep.subr.mxu0 0.0
      %650 = vmatpush1.msra.mxu0 0.0
      %651 = vmatprep.subr.mxu0 0.0
      %652 = vmatpush1.msra.mxu0 0.0
      %653 = vmatprep.subr.mxu0 0.0
      %654 = vmatpush1.msra.mxu0 0.0
      %655 = vmatprep.subr.mxu0 0.0
      %656 = vmatpush1.msra.mxu0 0.0
      %657 = vmatprep.mubr.f32.mxu0 0.0
      %658 = vmatmul.mubr.f32.gmra.mrb[0].mxu0 %v579
      %v659 = vpop.f32.mrb[0].mxu0
      %v660 = vadd.f32 0.0, %v659
      %v661 = vpop.f32.mrb[0].mxu0
      %v662 = vadd.f32 0.0, %v661
      %663 = vmatprep.mubr.f32.mxu0 0.0
      %664 = vmatmul.mubr.f32.gmra.mrb[0].mxu0 %v582
      %v665 = vpop.f32.mrb[0].mxu0
      %v666 = vadd.f32 0.0, %v665
      %v667 = vpop.f32.mrb[0].mxu0
      %v668 = vadd.f32 0.0, %v667
      %669 = vmatprep.mubr.f32.mxu0 0.0
      %670 = vmatmul.mubr.f32.gmra.mrb[0].mxu0 %v585
      %v671 = vpop.f32.mrb[0].mxu0
      %v672 = vadd.f32 0.0, %v671
      %v673 = vpop.f32.mrb[0].mxu0
      %v674 = vadd.f32 0.0, %v673
      %675 = vmatprep.mubr.f32.mxu0 0.0
      %676 = vmatmul.mubr.f32.gmra.mrb[0].mxu0 %v588
      %v677 = vpop.f32.mrb[0].mxu0
      %v678 = vadd.f32 0.0, %v677
      %v679 = vpop.f32.mrb[0].mxu0
      %v680 = vadd.f32 0.0, %v679
      %681 = vmatprep.mubr.f32.mxu0 0.0
      %682 = vmatmul.mubr.f32.gmra.mrb[0].mxu0 %v591
      %v683 = vpop.f32.mrb[0].mxu0
      %v684 = vadd.f32 0.0, %v683
      %v685 = vpop.f32.mrb[0].mxu0
      %v686 = vadd.f32 0.0, %v685
      %687 = vdwg.mxu0
      %688 = vst [vmem:[%s246] sm:$0xff] %v256
      %689 = vst [vmem:[%s246 + $0x8] sm:$0xff] %v257
      %690 = vst [vmem:[%s246 + $0x10] sm:$0xff] %v258
      %691 = vst [vmem:[%s246 + $0x18] sm:$0xff] %v259
      %692 = vst [vmem:[%s246 + $0x20] sm:$0xff] %v260
      %693 = vst [vmem:[%s246 + $0x28] sm:$0xff] %v261
      %694 = vst [vmem:[%s246 + $0x30] sm:$0xff] %v262
      %695 = vst [vmem:[%s246 + $0x38] sm:$0xff] %v263
      %696 = vst [vmem:[%s246 + $0x40] sm:$0xff] %v660
      %697 = vst [vmem:[%s246 + $0x48] sm:$0xff] %v662
      %698 = vst [vmem:[%s246 + $0x50] sm:$0xff] %v666
      %699 = vst [vmem:[%s246 + $0x58] sm:$0xff] %v668
      %700 = vst [vmem:[%s246 + $0x60] sm:$0xff] %v672
      %701 = vst [vmem:[%s246 + $0x68] sm:$0xff] %v674
      %702 = vst [vmem:[%s246 + $0x70] sm:$0xff] %v678
      %703 = vst [vmem:[%s246 + $0x78] sm:$0xff] %v680
      %704 = vst [vmem:[%s246 + $0x80] sm:$0xf] %v684
      %705 = vst [vmem:[%s246 + $0x88] sm:$0xf] %v686
      %706 = vxpose.xlu0.b32.start [1/16] %v407, 128
      %707 = vxpose.xlu0.b32.cont [2/16] %v413, 128
      %708 = vxpose.xlu0.b32.cont [3/16] %v419, 128
      %709 = vxpose.xlu0.b32.cont [4/16] %v425, 128
      %710 = vxpose.xlu0.b32.cont [5/16] %v431, 128
      %711 = vxpose.xlu0.b32.cont [6/16] %v437, 128
      %712 = vxpose.xlu0.b32.cont [7/16] %v443, 128
      %713 = vxpose.xlu0.b32.cont [8/16] %v449, 128
      %714 = vxpose.xlu0.b32.cont [9/16] 0.0, 128
      %715 = vxpose.xlu0.b32.cont [10/16] 0.0, 128
      %716 = vxpose.xlu0.b32.cont [11/16] 0.0, 128
      %717 = vxpose.xlu0.b32.cont [12/16] 0.0, 128
      %718 = vxpose.xlu0.b32.cont [13/16] 0.0, 128
      %719 = vxpose.xlu0.b32.cont [14/16] 0.0, 128
      %720 = vxpose.xlu0.b32.cont [15/16] 0.0, 128
      %721 = vxpose.xlu0.b32.end [16/16] 0.0, 128
      %v722 = vpop.trf.xlu0
      %v723 = vpop.trf.xlu0
      %v724 = vpop.trf.xlu0
      %v725 = vpop.trf.xlu0
      %v726 = vpop.trf.xlu0
      %v727 = vpop.trf.xlu0
      %v728 = vpop.trf.xlu0
      %v729 = vpop.trf.xlu0
      %v730 = vpop.trf.xlu0
      %v731 = vpop.trf.xlu0
      %v732 = vpop.trf.xlu0
      %v733 = vpop.trf.xlu0
      %v734 = vpop.trf.xlu0
      %v735 = vpop.trf.xlu0
      %v736 = vpop.trf.xlu0
      %v737 = vpop.trf.xlu0
      %738 = vxpose.xlu0.b32.start [1/16] %v409, 128
      %739 = vxpose.xlu0.b32.cont [2/16] %v415, 128
      %740 = vxpose.xlu0.b32.cont [3/16] %v421, 128
      %741 = vxpose.xlu0.b32.cont [4/16] %v427, 128
      %742 = vxpose.xlu0.b32.cont [5/16] %v433, 128
      %743 = vxpose.xlu0.b32.cont [6/16] %v439, 128
      %744 = vxpose.xlu0.b32.cont [7/16] %v445, 128
      %745 = vxpose.xlu0.b32.cont [8/16] %v451, 128
      %746 = vxpose.xlu0.b32.cont [9/16] 0.0, 128
      %747 = vxpose.xlu0.b32.cont [10/16] 0.0, 128
      %748 = vxpose.xlu0.b32.cont [11/16] 0.0, 128
      %749 = vxpose.xlu0.b32.cont [12/16] 0.0, 128
      %750 = vxpose.xlu0.b32.cont [13/16] 0.0, 128
      %751 = vxpose.xlu0.b32.cont [14/16] 0.0, 128
      %752 = vxpose.xlu0.b32.cont [15/16] 0.0, 128
      %753 = vxpose.xlu0.b32.end [16/16] 0.0, 128
      %v754 = vpop.trf.xlu0
      %v755 = vpop.trf.xlu0
      %v756 = vpop.trf.xlu0
      %v757 = vpop.trf.xlu0
      %v758 = vpop.trf.xlu0
      %v759 = vpop.trf.xlu0
      %v760 = vpop.trf.xlu0
      %v761 = vpop.trf.xlu0
      %v762 = vpop.trf.xlu0
      %v763 = vpop.trf.xlu0
      %v764 = vpop.trf.xlu0
      %v765 = vpop.trf.xlu0
      %v766 = vpop.trf.xlu0
      %v767 = vpop.trf.xlu0
      %v768 = vpop.trf.xlu0
      %v769 = vpop.trf.xlu0
      %770 = vst.msk [vmem:[%s253] sm:$0xff] %vm577, %v722
      %771 = vst.msk [vmem:[%s253 + $0x8] sm:$0xff] %vm577, %v723
      %772 = vst.msk [vmem:[%s253 + $0x10] sm:$0xff] %vm577, %v724
      %773 = vst.msk [vmem:[%s253 + $0x18] sm:$0xff] %vm577, %v725
      %774 = vst.msk [vmem:[%s253 + $0x20] sm:$0xff] %vm577, %v726
      %775 = vst.msk [vmem:[%s253 + $0x28] sm:$0xff] %vm577, %v727
      %776 = vst.msk [vmem:[%s253 + $0x30] sm:$0xff] %vm577, %v728
      %777 = vst.msk [vmem:[%s253 + $0x38] sm:$0xff] %vm577, %v729
      %778 = vst.msk [vmem:[%s253 + $0x40] sm:$0xff] %vm577, %v730
      %779 = vst.msk [vmem:[%s253 + $0x48] sm:$0xff] %vm577, %v731
      %780 = vst.msk [vmem:[%s253 + $0x50] sm:$0xff] %vm577, %v732
      %781 = vst.msk [vmem:[%s253 + $0x58] sm:$0xff] %vm577, %v733
      %782 = vst.msk [vmem:[%s253 + $0x60] sm:$0xff] %vm577, %v734
      %783 = vst.msk [vmem:[%s253 + $0x68] sm:$0xff] %vm577, %v735
      %784 = vst.msk [vmem:[%s253 + $0x70] sm:$0xff] %vm577, %v736
      %785 = vst.msk [vmem:[%s253 + $0x78] sm:$0xff] %vm577, %v737
      %786 = vst.msk [vmem:[%s253 + $0x80] sm:$0xff] %vm577, %v754
      %787 = vst.msk [vmem:[%s253 + $0x88] sm:$0xff] %vm577, %v755
      %788 = vst.msk [vmem:[%s253 + $0x90] sm:$0xff] %vm577, %v756
      %789 = vst.msk [vmem:[%s253 + $0x98] sm:$0xff] %vm577, %v757
      %790 = vst.msk [vmem:[%s253 + $0xa0] sm:$0xff] %vm577, %v758
      %791 = vst.msk [vmem:[%s253 + $0xa8] sm:$0xff] %vm577, %v759
      %792 = vst.msk [vmem:[%s253 + $0xb0] sm:$0xff] %vm577, %v760
      %793 = vst.msk [vmem:[%s253 + $0xb8] sm:$0xff] %vm577, %v761
      %794 = vst.msk [vmem:[%s253 + $0xc0] sm:$0xff] %vm577, %v762
      %795 = vst.msk [vmem:[%s253 + $0xc8] sm:$0xff] %vm577, %v763
      %796 = vst.msk [vmem:[%s253 + $0xd0] sm:$0xff] %vm577, %v764
      %797 = vst.msk [vmem:[%s253 + $0xd8] sm:$0xff] %vm577, %v765
      %798 = vst.msk [vmem:[%s253 + $0xe0] sm:$0xff] %vm577, %v766
      %799 = vst.msk [vmem:[%s253 + $0xe8] sm:$0xff] %vm577, %v767
      %800 = vst.msk [vmem:[%s253 + $0xf0] sm:$0xff] %vm577, %v768
      %801 = vst.msk [vmem:[%s253 + $0xf8] sm:$0xff] %vm577, %v769
      %s802 = smul.u32 2, %s21
      %p803 = scmp.lt.s32.totalorder %s20, 1
      %s804 = scalar_select %p803, %s20, 1
      %p805 = scmp.lt.s32.totalorder %s802, 1
      %s806 = scalar_select %p805, %s802, 1
      %s807 = smul.addr %s804, 18
      %s808 = sadd.s32 %s806, %s807
      %s809 = smul.addr %s808, 8
      %s810 = scalar_lea.vmem %s3, %s809
      %s811 = sadd.s32 %s20, %s21
      %s812 = smul.u32 32, %s811
      %p813 = scmp.lt.s32.totalorder %s812, 63
      %s814 = scalar_select %p813, %s812, 63
      %s815 = smul.addr %s814, 8
      %s816 = scalar_lea.vmem %s4, %s815
      // Predicated region
      $region33: #{memory_n2n_forward_all.1} parent=31 // pred_check
        %p817 = pneg %p118
      $region34: #{memory_n2n_forward_all.1} parent=31 // pred_check_branch
        %819 = sbr.rel (%p817) target = $region36
      $region35: #{memory_n2n_forward_all.1} parent=31 // pred_region
        %s820 = smul.u32 2, %s21
      $region36: #{memory_n2n_forward_all.1} parent=31 // pred_fallthru
        _
      // Predicated region
      $region37: #{memory_n2n_forward_all.1} parent=31 // pred_check
        %p821 = pneg %p146
      $region38: #{memory_n2n_forward_all.1} parent=31 // pred_check_branch
        %823 = sbr.rel (%p821) target = $region40
      $region39: #{memory_n2n_forward_all.1} parent=31 // pred_region
        %s824 = sadd.s32 %s20, %s21
        %s825 = smul.u32 32, %s824
      $region40: #{memory_n2n_forward_all.1} parent=31 // pred_fallthru
        _
    $region32: #{memory_n2n_forward_all.1} parent=5 // pred_fallthru
      _
    %p826 = scmp.le.s32.totalorder 2, %s11
    // Predicated region
    $region41: #{memory_n2n_forward_all.1} parent=5 // pred_check
      %p827 = pneg %p826
    $region42: #{memory_n2n_forward_all.1} parent=5 // pred_check_branch
      %829 = sbr.rel (%p827) target = $region44
    $region43: #{memory_n2n_forward_all.1} parent=5 // pred_region
      %s830 = ssub.s32 %s11, 2
      // Predicated region
      $region45: #{memory_n2n_forward_all.1} parent=43 // pred_check
        %p831 = pneg %p124
      $region46: #{memory_n2n_forward_all.1} parent=43 // pred_check_branch
        %833 = sbr.rel (%p831) target = $region48
      $region47: #{memory_n2n_forward_all.1} parent=43 // pred_region
        %s834 = smul.u32 2, %s23
        %p835 = scmp.lt.s32.totalorder %s22, 1
        %s836 = scalar_select %p835, %s22, 1
        %p837 = scmp.lt.s32.totalorder %s834, 1
        %s838 = scalar_select %p837, %s834, 1
        %s839 = smul.addr %s836, 18
        %s840 = sadd.s32 %s838, %s839
        %s841 = smul.addr %s840, 8
        %s842 = scalar_lea.vmem %s3, %s841
      $region48: #{memory_n2n_forward_all.1} parent=43 // pred_fallthru
        _
      // Predicated region
      $region49: #{memory_n2n_forward_all.1} parent=43 // pred_check
        %p843 = pneg %p152
      $region50: #{memory_n2n_forward_all.1} parent=43 // pred_check_branch
        %845 = sbr.rel (%p843) target = $region52
      $region51: #{memory_n2n_forward_all.1} parent=43 // pred_region
        %s846 = sadd.s32 %s22, %s23
        %s847 = smul.u32 32, %s846
        %p848 = scmp.lt.s32.totalorder %s847, 63
        %s849 = scalar_select %p848, %s847, 63
        %s850 = smul.addr %s849, 8
        %s851 = scalar_lea.vmem %s4, %s850
      $region52: #{memory_n2n_forward_all.1} parent=43 // pred_fallthru
        _
    $region44: #{memory_n2n_forward_all.1} parent=5 // pred_fallthru
      _
  $region6: #{memory_n2n_forward_all.1} parent=0 // loop_footer
    %s15 = sadd.s32 1, %s11
  $region7: #{memory_n2n_forward_all.1} parent=0 // loop_footer_branch
    %10 = sbr.rel target = $region3
  $region8: #{memory_n2n_forward_all.1} parent=0 // loop_exit
    _

</llo_original>
